<compile_context>
chip_gen: v6e
topology: v6e:2x2x1
jax: 0.10.0
libtpu: 0.0.40
codegen_flags: <defaults>
</compile_context>

<pallas_src>
import math

import jax
import jax.numpy as jnp
from jax import lax
from jax.experimental import pallas as pl
from jax.experimental.pallas import tpu as pltpu

NUM_FEATURES = 549
NUM_CLASSES = 7
HIDDEN = (256, 128, 64)

H3_PAD = 128    # pad 64-wide hidden layer to a full lane width
OUT_PAD = 128   # lane-dense output (classes padded 7 -> 128)


def _gelu_exact(x):
    # Matches torch.nn.functional.gelu(x) with approximate='none' (erf-based).
    return 0.5 * x * (1.0 + lax.erf(x * (1.0 / jnp.sqrt(2.0).astype(x.dtype))))


def mlp_kernel(x_ref,
               w1_ref, b1_ref,
               w2_ref, b2_ref,
               w3_ref, b3_ref,
               w4_ref, b4_ref,
               o_ref):
    bf16 = jnp.bfloat16
    # Cast the f32 x tile to bf16 in VMEM (avoids materializing a bf16 copy in HBM).
    x = x_ref[...].astype(bf16)                                       # (TB, 549)

    h = jnp.dot(x, w1_ref[...], preferred_element_type=jnp.float32)   # (TB, 256) f32
    h = _gelu_exact(h + b1_ref[...])

    h = jnp.dot(h.astype(bf16), w2_ref[...],
                preferred_element_type=jnp.float32)                   # (TB, 128)
    h = _gelu_exact(h + b2_ref[...])

    h = jnp.dot(h.astype(bf16), w3_ref[...],
                preferred_element_type=jnp.float32)                   # (TB, 128) padded
    h = _gelu_exact(h + b3_ref[...])

    out = jnp.dot(h.astype(bf16), w4_ref[...],
                  preferred_element_type=jnp.float32)                 # (TB, 128) padded
    o_ref[...] = (out + b4_ref[...]).astype(o_ref.dtype)


def _round_up(n, m):
    return ((n + m - 1) // m) * m


def diagnosis_classifier_forward(x, params, *, block_b=1024):
    """x: (B, 549) float32.  params: dict of weights (in,out) f32 and biases (1,out) f32."""
    B = x.shape[0]

    # Tile the batch: n_tiles tiles of TB rows (TB multiple of 8); padding waste < TB.
    n_tiles = max(1, math.ceil(B / block_b))
    TB = _round_up(math.ceil(B / n_tiles), 8)
    B_pad = n_tiles * TB

    if B_pad != B:
        x = jnp.zeros((B_pad, NUM_FEATURES), x.dtype).at[:B, :].set(x)

    bf16 = jnp.bfloat16
    # Weights as bf16 (MXU-native); biases stay f32 (added to the f32 accumulator).
    w1 = params["w1"].astype(bf16)                                    # (549, 256)
    b1 = params["b1"]
    w2 = params["w2"].astype(bf16)                                    # (256, 128)
    b2 = params["b2"]
    # Pad hidden layer 3: 64 -> 128 output columns (zeros); GELU(0) = 0, so exact.
    w3 = jnp.zeros((HIDDEN[1], H3_PAD), bf16).at[:, :HIDDEN[2]].set(
        params["w3"].astype(bf16))
    b3 = jnp.zeros((1, H3_PAD), jnp.float32).at[:, :HIDDEN[2]].set(params["b3"])
    # Final layer: pad input rows 64 -> 128 and output cols 7 -> 128 (lane-dense store).
    w4 = jnp.zeros((H3_PAD, OUT_PAD), bf16).at[:HIDDEN[2], :NUM_CLASSES].set(
        params["w4"].astype(bf16))
    b4 = jnp.zeros((1, OUT_PAD), jnp.float32).at[:, :NUM_CLASSES].set(params["b4"])

    # Weights/biases: same block every grid step -> stay resident in VMEM (~0.35 MB).
    resident = lambda arr: pl.BlockSpec(arr.shape, lambda i: (0, 0))

    out = pl.pallas_call(
        mlp_kernel,
        out_shape=jax.ShapeDtypeStruct((B_pad, OUT_PAD), jnp.float32),
        grid_spec=pltpu.PrefetchScalarGridSpec(
            num_scalar_prefetch=0,
            grid=(n_tiles,),
            in_specs=[
                # x block: last dim equals the full array dim (549), so no (8,128)
                # divisibility requirement; Mosaic masks the ragged K tail.
                pl.BlockSpec((TB, NUM_FEATURES), lambda i: (i, 0)),
                resident(w1), resident(b1),
                resident(w2), resident(b2),
                resident(w3), resident(b3),
                resident(w4), resident(b4),
            ],
            out_specs=pl.BlockSpec((TB, OUT_PAD), lambda i: (i, 0)),
        ),
        compiler_params=pltpu.CompilerParams(
            dimension_semantics=("parallel",)),   # v7x: shard batch tiles over 2 TCs
    )(x, w1, b1, w2, b2, w3, b3, w4, b4)

    return out[:B, :NUM_CLASSES]


def init_params(key):
    """Deterministic init mimicking nn.Linear's uniform(-1/sqrt(fan_in), 1/sqrt(fan_in))."""
    dims = (NUM_FEATURES,) + HIDDEN + (NUM_CLASSES,)
    params = {}
    for i in range(4):
        fan_in, fan_out = dims[i], dims[i + 1]
        key, kw, kb = jax.random.split(key, 3)
        bound = 1.0 / jnp.sqrt(float(fan_in))
        params[f"w{i+1}"] = jax.random.uniform(
            kw, (fan_in, fan_out), jnp.float32, -bound, bound)
        params[f"b{i+1}"] = jax.random.uniform(
            kb, (1, fan_out), jnp.float32, -bound, bound)
    return params


def reference_forward_f32(x, params):
    h = _gelu_exact(x @ params["w1"] + params["b1"])
    h = _gelu_exact(h @ params["w2"] + params["b2"])
    h = _gelu_exact(h @ params["w3"] + params["b3"])
    return h @ params["w4"] + params["b4"]


def reference_forward_bf16(x, params):
    """Emulates the kernel's numerics: bf16 matmul operands, f32 accumulation."""
    bf16 = jnp.bfloat16

    def lin(h, w, b):
        return jnp.dot(h.astype(bf16), w.astype(bf16),
                       preferred_element_type=jnp.float32) + b

    h = _gelu_exact(lin(x, params["w1"], params["b1"]))
    h = _gelu_exact(lin(h, params["w2"], params["b2"]))
    h = _gelu_exact(lin(h, params["w3"], params["b3"]))
    return lin(h, params["w4"], params["b4"])


if __name__ == "__main__":
    key = jax.random.PRNGKey(0)
    key, kx, kp = jax.random.split(key, 3)

    B = 8
    x = jax.random.normal(kx, (B, NUM_FEATURES), jnp.float32)
    params = init_params(kp)

    out = diagnosis_classifier_forward(x, params)
    out = jax.block_until_ready(out)
    assert out.shape == (B, NUM_CLASSES), out.shape

    # Tight check against a bf16-operand / f32-accumulate reference (same numerics).
    ref_bf16 = reference_forward_bf16(x, params)
    assert jnp.allclose(out, ref_bf16, atol=2e-3, rtol=2e-3), \
        f"bf16-ref max abs err {jnp.max(jnp.abs(out - ref_bf16))}"

    # Loose sanity check against the full-f32 reference (bf16 operand rounding).
    ref_f32 = reference_forward_f32(x, params)
    assert jnp.allclose(out, ref_f32, atol=5e-2, rtol=5e-2), \
        f"f32-ref max abs err {jnp.max(jnp.abs(out - ref_f32))}"

    print("KERNEL_OK")
</pallas_src>

<mosaic_0001>
module attributes {stable_mosaic.version = 11 : i64} {
  func.func @mlp_kernel(%arg0: i32, %arg1: memref<8x549xf32, #tpu.memory_space<vmem>>, %arg2: memref<549x256xbf16, #tpu.memory_space<vmem>>, %arg3: memref<1x256xf32, #tpu.memory_space<vmem>>, %arg4: memref<256x128xbf16, #tpu.memory_space<vmem>>, %arg5: memref<1x128xf32, #tpu.memory_space<vmem>>, %arg6: memref<128x128xbf16, #tpu.memory_space<vmem>>, %arg7: memref<1x128xf32, #tpu.memory_space<vmem>>, %arg8: memref<128x128xbf16, #tpu.memory_space<vmem>>, %arg9: memref<1x128xf32, #tpu.memory_space<vmem>>, %arg10: memref<8x128xf32, #tpu.memory_space<vmem>>) attributes {dimension_semantics = [#tpu.dimension_semantics<parallel>], iteration_bounds = array<i64: 1>, scalar_prefetch = 0 : i64, scratch_operands = 0 : i64, tpu.core_type = #tpu.core_type<tc>, window_params = [{transform_indices = @transform_0, window_bounds = array<i64: 8, 549>}, {pipeline_mode = #tpu.pipeline_mode<synchronous>, transform_indices = @transform_1, window_bounds = array<i64: 549, 256>}, {pipeline_mode = #tpu.pipeline_mode<synchronous>, transform_indices = @transform_2, window_bounds = array<i64: 1, 256>}, {pipeline_mode = #tpu.pipeline_mode<synchronous>, transform_indices = @transform_3, window_bounds = array<i64: 256, 128>}, {pipeline_mode = #tpu.pipeline_mode<synchronous>, transform_indices = @transform_4, window_bounds = array<i64: 1, 128>}, {pipeline_mode = #tpu.pipeline_mode<synchronous>, transform_indices = @transform_5, window_bounds = array<i64: 128, 128>}, {pipeline_mode = #tpu.pipeline_mode<synchronous>, transform_indices = @transform_6, window_bounds = array<i64: 1, 128>}, {pipeline_mode = #tpu.pipeline_mode<synchronous>, transform_indices = @transform_7, window_bounds = array<i64: 128, 128>}, {pipeline_mode = #tpu.pipeline_mode<synchronous>, transform_indices = @transform_8, window_bounds = array<i64: 1, 128>}, {transform_indices = @transform_9, window_bounds = array<i64: 8, 128>}]} {
    %c0 = arith.constant 0 : index
    %c0_0 = arith.constant 0 : index
    %0 = vector.load %arg1[%c0, %c0_0] : memref<8x549xf32, #tpu.memory_space<vmem>>, vector<8x549xf32>
    %1 = arith.truncf %0 : vector<8x549xf32> to vector<8x549xbf16>
    %c0_1 = arith.constant 0 : index
    %c0_2 = arith.constant 0 : index
    %2 = vector.load %arg2[%c0_1, %c0_2] : memref<549x256xbf16, #tpu.memory_space<vmem>>, vector<549x256xbf16>
    %cst = arith.constant dense<0.000000e+00> : vector<8x256xf32>
    %3 = tpu.matmul %1, %2, %cst {dimension_numbers = #tpu.dot_dimension_numbers<[1], [0], [0], [1], [0, 0, 1, 1], [], []>} : vector<8x549xbf16>, vector<549x256xbf16>, vector<8x256xf32> -> vector<8x256xf32>
    %c0_3 = arith.constant 0 : index
    %c0_4 = arith.constant 0 : index
    %4 = vector.load %arg3[%c0_3, %c0_4] : memref<1x256xf32, #tpu.memory_space<vmem>>, vector<1x256xf32>
    %5 = vector.broadcast %4 : vector<1x256xf32> to vector<8x256xf32>
    %6 = arith.addf %3, %5 : vector<8x256xf32>
    %cst_5 = arith.constant 5.000000e-01 : f32
    %7 = vector.broadcast %cst_5 : f32 to vector<8x256xf32>
    %8 = arith.mulf %7, %6 : vector<8x256xf32>
    %cst_6 = arith.constant 2.000000e+00 : f32
    %9 = math.sqrt %cst_6 : f32
    %cst_7 = arith.constant 1.000000e+00 : f32
    %10 = arith.divf %cst_7, %9 : f32
    %11 = vector.broadcast %10 : f32 to vector<8x256xf32>
    %12 = arith.mulf %6, %11 : vector<8x256xf32>
    %13 = math.erf %12 : vector<8x256xf32>
    %cst_8 = arith.constant 1.000000e+00 : f32
    %14 = vector.broadcast %cst_8 : f32 to vector<8x256xf32>
    %15 = arith.addf %14, %13 : vector<8x256xf32>
    %16 = arith.mulf %8, %15 : vector<8x256xf32>
    %17 = arith.truncf %16 : vector<8x256xf32> to vector<8x256xbf16>
    %c0_9 = arith.constant 0 : index
    %c0_10 = arith.constant 0 : index
    %18 = vector.load %arg4[%c0_9, %c0_10] : memref<256x128xbf16, #tpu.memory_space<vmem>>, vector<256x128xbf16>
    %cst_11 = arith.constant dense<0.000000e+00> : vector<8x128xf32>
    %19 = tpu.matmul %17, %18, %cst_11 {dimension_numbers = #tpu.dot_dimension_numbers<[1], [0], [0], [1], [0, 0, 1, 1], [], []>} : vector<8x256xbf16>, vector<256x128xbf16>, vector<8x128xf32> -> vector<8x128xf32>
    %c0_12 = arith.constant 0 : index
    %c0_13 = arith.constant 0 : index
    %20 = vector.load %arg5[%c0_12, %c0_13] : memref<1x128xf32, #tpu.memory_space<vmem>>, vector<1x128xf32>
    %21 = vector.broadcast %20 : vector<1x128xf32> to vector<8x128xf32>
    %22 = arith.addf %19, %21 : vector<8x128xf32>
    %cst_14 = arith.constant 5.000000e-01 : f32
    %23 = vector.broadcast %cst_14 : f32 to vector<8x128xf32>
    %24 = arith.mulf %23, %22 : vector<8x128xf32>
    %cst_15 = arith.constant 2.000000e+00 : f32
    %25 = math.sqrt %cst_15 : f32
    %cst_16 = arith.constant 1.000000e+00 : f32
    %26 = arith.divf %cst_16, %25 : f32
    %27 = vector.broadcast %26 : f32 to vector<8x128xf32>
    %28 = arith.mulf %22, %27 : vector<8x128xf32>
    %29 = math.erf %28 : vector<8x128xf32>
    %cst_17 = arith.constant 1.000000e+00 : f32
    %30 = vector.broadcast %cst_17 : f32 to vector<8x128xf32>
    %31 = arith.addf %30, %29 : vector<8x128xf32>
    %32 = arith.mulf %24, %31 : vector<8x128xf32>
    %33 = arith.truncf %32 : vector<8x128xf32> to vector<8x128xbf16>
    %c0_18 = arith.constant 0 : index
    %c0_19 = arith.constant 0 : index
    %34 = vector.load %arg6[%c0_18, %c0_19] : memref<128x128xbf16, #tpu.memory_space<vmem>>, vector<128x128xbf16>
    %cst_20 = arith.constant dense<0.000000e+00> : vector<8x128xf32>
    %35 = tpu.matmul %33, %34, %cst_20 {dimension_numbers = #tpu.dot_dimension_numbers<[1], [0], [0], [1], [0, 0, 1, 1], [], []>} : vector<8x128xbf16>, vector<128x128xbf16>, vector<8x128xf32> -> vector<8x128xf32>
    %c0_21 = arith.constant 0 : index
    %c0_22 = arith.constant 0 : index
    %36 = vector.load %arg7[%c0_21, %c0_22] : memref<1x128xf32, #tpu.memory_space<vmem>>, vector<1x128xf32>
    %37 = vector.broadcast %36 : vector<1x128xf32> to vector<8x128xf32>
    %38 = arith.addf %35, %37 : vector<8x128xf32>
    %cst_23 = arith.constant 5.000000e-01 : f32
    %39 = vector.broadcast %cst_23 : f32 to vector<8x128xf32>
    %40 = arith.mulf %39, %38 : vector<8x128xf32>
    %cst_24 = arith.constant 2.000000e+00 : f32
    %41 = math.sqrt %cst_24 : f32
    %cst_25 = arith.constant 1.000000e+00 : f32
    %42 = arith.divf %cst_25, %41 : f32
    %43 = vector.broadcast %42 : f32 to vector<8x128xf32>
    %44 = arith.mulf %38, %43 : vector<8x128xf32>
    %45 = math.erf %44 : vector<8x128xf32>
    %cst_26 = arith.constant 1.000000e+00 : f32
    %46 = vector.broadcast %cst_26 : f32 to vector<8x128xf32>
    %47 = arith.addf %46, %45 : vector<8x128xf32>
    %48 = arith.mulf %40, %47 : vector<8x128xf32>
    %49 = arith.truncf %48 : vector<8x128xf32> to vector<8x128xbf16>
    %c0_27 = arith.constant 0 : index
    %c0_28 = arith.constant 0 : index
    %50 = vector.load %arg8[%c0_27, %c0_28] : memref<128x128xbf16, #tpu.memory_space<vmem>>, vector<128x128xbf16>
    %cst_29 = arith.constant dense<0.000000e+00> : vector<8x128xf32>
    %51 = tpu.matmul %49, %50, %cst_29 {dimension_numbers = #tpu.dot_dimension_numbers<[1], [0], [0], [1], [0, 0, 1, 1], [], []>} : vector<8x128xbf16>, vector<128x128xbf16>, vector<8x128xf32> -> vector<8x128xf32>
    %c0_30 = arith.constant 0 : index
    %c0_31 = arith.constant 0 : index
    %52 = vector.load %arg9[%c0_30, %c0_31] : memref<1x128xf32, #tpu.memory_space<vmem>>, vector<1x128xf32>
    %53 = vector.broadcast %52 : vector<1x128xf32> to vector<8x128xf32>
    %54 = arith.addf %51, %53 : vector<8x128xf32>
    %c0_32 = arith.constant 0 : index
    %c0_33 = arith.constant 0 : index
    %55 = vector.load %arg10[%c0_32, %c0_33] : memref<8x128xf32, #tpu.memory_space<vmem>>, vector<8x128xf32>
    tpu.vector_store %arg10[%c0_32, %c0_33], %54 {strides = array<i32>} : memref<8x128xf32, #tpu.memory_space<vmem>>, vector<8x128xf32>,
    return
  }
  func.func @transform_0(%arg0: i32) -> (i32, i32) {
    %c0_i32 = arith.constant 0 : i32
    %c0_i32_0 = arith.constant 0 : i32
    return %arg0, %c0_i32 : i32, i32
  }
  func.func @transform_1(%arg0: i32) -> (i32, i32) {
    %c0_i32 = arith.constant 0 : i32
    %c0_i32_0 = arith.constant 0 : i32
    %c0_i32_1 = arith.constant 0 : i32
    return %c0_i32, %c0_i32_0 : i32, i32
  }
  func.func @transform_2(%arg0: i32) -> (i32, i32) {
    %c0_i32 = arith.constant 0 : i32
    %c0_i32_0 = arith.constant 0 : i32
    %c0_i32_1 = arith.constant 0 : i32
    return %c0_i32, %c0_i32_0 : i32, i32
  }
  func.func @transform_3(%arg0: i32) -> (i32, i32) {
    %c0_i32 = arith.constant 0 : i32
    %c0_i32_0 = arith.constant 0 : i32
    %c0_i32_1 = arith.constant 0 : i32
    return %c0_i32, %c0_i32_0 : i32, i32
  }
  func.func @transform_4(%arg0: i32) -> (i32, i32) {
    %c0_i32 = arith.constant 0 : i32
    %c0_i32_0 = arith.constant 0 : i32
    %c0_i32_1 = arith.constant 0 : i32
    return %c0_i32, %c0_i32_0 : i32, i32
  }
  func.func @transform_5(%arg0: i32) -> (i32, i32) {
    %c0_i32 = arith.constant 0 : i32
    %c0_i32_0 = arith.constant 0 : i32
    %c0_i32_1 = arith.constant 0 : i32
    return %c0_i32, %c0_i32_0 : i32, i32
  }
  func.func @transform_6(%arg0: i32) -> (i32, i32) {
    %c0_i32 = arith.constant 0 : i32
    %c0_i32_0 = arith.constant 0 : i32
    %c0_i32_1 = arith.constant 0 : i32
    return %c0_i32, %c0_i32_0 : i32, i32
  }
  func.func @transform_7(%arg0: i32) -> (i32, i32) {
    %c0_i32 = arith.constant 0 : i32
    %c0_i32_0 = arith.constant 0 : i32
    %c0_i32_1 = arith.constant 0 : i32
    return %c0_i32, %c0_i32_0 : i32, i32
  }
  func.func @transform_8(%arg0: i32) -> (i32, i32) {
    %c0_i32 = arith.constant 0 : i32
    %c0_i32_0 = arith.constant 0 : i32
    %c0_i32_1 = arith.constant 0 : i32
    return %c0_i32, %c0_i32_0 : i32, i32
  }
  func.func @transform_9(%arg0: i32) -> (i32, i32) {
    %c0_i32 = arith.constant 0 : i32
    %c0_i32_0 = arith.constant 0 : i32
    return %arg0, %c0_i32 : i32, i32
  }
}

</mosaic_0001>

<llo_original>
// kernel: tpu_custom_call.1
$region0: #{tpu_custom_call.1}
  #allocation0 [shape = 'u32[]', space=smem, size = 0x4, offset = 0x4, fixed_abs, tag = 'smem constant byte address 0x4 - core index']
  #allocation1 [shape = 'u32[144,128]{1,0:T(1,128)}', space=vmem, size = 0x12000, scoped, tag = 'internal scratch']
  %s0 = inlined_call_operand.hbm [shape: f32[8,549], index: 0, kind: input, shape index: {}]
  %s1 = inlined_call_operand.hbm [shape: bf16[549,256], index: 1, kind: input, shape index: {}]
  %s2 = inlined_call_operand.vmem [shape: f32[1,256], index: 2, kind: input, shape index: {}]
  %s3 = inlined_call_operand.hbm [shape: bf16[256,128], index: 3, kind: input, shape index: {}]
  %s4 = inlined_call_operand.vmem [shape: f32[1,128], index: 4, kind: input, shape index: {}]
  %s5 = inlined_call_operand.hbm [shape: bf16[128,128], index: 5, kind: input, shape index: {}]
  %s6 = inlined_call_operand.vmem [shape: f32[1,128], index: 6, kind: input, shape index: {}]
  %s7 = inlined_call_operand.hbm [shape: bf16[128,128], index: 7, kind: input, shape index: {}]
  %s8 = inlined_call_operand.vmem [shape: f32[1,128], index: 8, kind: input, shape index: {}]
  %s9 = inlined_call_operand.hbm [shape: f32[8,128], index: 9, kind: output, shape index: {}]
  %s10 = sld [smem:[#allocation0]]
  $region66: #{tpu_custom_call.1} parent=0
    _
  %s12 = ssub.s32 1, %s10
  %s13 = scalar_select 0, %s12, %s10
  $region1: #{tpu_custom_call.1} parent=0
    #allocation2 [shape = 'u8[20480]{0}', space=vmem, size = 0x5000, scoped, tag = 'input window, operand 0, single buffered']
    #allocation3 [shape = 's32[1]{0}', space=sflag, size = 0x4, scoped, tag = 'scoped memory for tpu_custom_call.1']
    #allocation4 [shape = 's32[1]{0}', space=sflag, size = 0x4, scoped, tag = 'scoped memory for tpu_custom_call.1']
    #allocation5 [shape = 'u8[282624]{0}', space=vmem, size = 0x45000, scoped, tag = 'input window, operand 1, single buffered']
    #allocation6 [shape = 's32[1]{0}', space=sflag, size = 0x4, scoped, tag = 'scoped memory for tpu_custom_call.1']
    #allocation7 [shape = 'u8[65536]{0}', space=vmem, size = 0x10000, scoped, tag = 'input window, operand 3, single buffered']
    #allocation8 [shape = 'u8[32768]{0}', space=vmem, size = 0x8000, scoped, tag = 'input window, operand 5, single buffered']
    #allocation9 [shape = 's32[1]{0}', space=sflag, size = 0x4, scoped, tag = 'scoped memory for tpu_custom_call.1']
    #allocation10 [shape = 'u8[32768]{0}', space=vmem, size = 0x8000, scoped, tag = 'input window, operand 7, single buffered']
    #allocation11 [shape = 'u8[4096]{0}', space=vmem, size = 0x1000, scoped, tag = 'output window, operand 0, single buffered']
    %14 = vsyncpa [#allocation3], 0
    %15 = vsyncpa [#allocation6], 0
    %16 = vsyncpa [#allocation9], 0
    %17 = vsyncpa [#allocation4], 0
    // Predicated region
    $region2: #{tpu_custom_call.1} parent=1 // pred_check
      _
    $region3: #{tpu_custom_call.1} parent=1 // pred_check_branch
      %19 = sbr.rel (0) target = $region5
    $region4: #{tpu_custom_call.1} parent=1 // pred_region
      %s21 = ssub.s32 640, 640
      %22 = vsyncadd [#allocation3], %s21
      %s24 = sshll.u32 [#allocation2], 4
      %s25 = int_to_ptr.vmem [resolvable:$true] %s24
      %27 = dma.hbm_to_vmem [thread:$0]  %s0, 640, %s25, [#allocation3]
    $region5: #{tpu_custom_call.1} parent=1 // pred_fallthru
      _
    // Predicated region
    $region6: #{tpu_custom_call.1} parent=1 // pred_check
      _
    $region7: #{tpu_custom_call.1} parent=1 // pred_check_branch
      %29 = sbr.rel (0) target = $region9
    $region8: #{tpu_custom_call.1} parent=1 // pred_region
      %s31 = ssub.s32 8832, 8832
      %32 = vsyncadd [#allocation6], %s31
      %s33 = sshll.u32 [#allocation5], 4
      %s34 = int_to_ptr.vmem [resolvable:$true] %s33
      %39 = dma.hbm_to_vmem [thread:$0]  %s1, 8832, %s34, [#allocation6], 128, 128, 8
    $region9: #{tpu_custom_call.1} parent=1 // pred_fallthru
      _
    // Predicated region
    $region10: #{tpu_custom_call.1} parent=1 // pred_check
      _
    $region11: #{tpu_custom_call.1} parent=1 // pred_check_branch
      %41 = sbr.rel (0) target = $region13
    $region12: #{tpu_custom_call.1} parent=1 // pred_region
      _
    $region13: #{tpu_custom_call.1} parent=1 // pred_fallthru
      _
    // Predicated region
    $region14: #{tpu_custom_call.1} parent=1 // pred_check
      _
    $region15: #{tpu_custom_call.1} parent=1 // pred_check_branch
      %43 = sbr.rel (0) target = $region17
    $region16: #{tpu_custom_call.1} parent=1 // pred_region
      %s45 = ssub.s32 2048, 2048
      %46 = vsyncadd [#allocation6], %s45
      %s47 = sshll.u32 [#allocation7], 4
      %s48 = int_to_ptr.vmem [resolvable:$true] %s47
      %53 = dma.hbm_to_vmem [thread:$0]  %s3, 2048, %s48, [#allocation6], 64, 64, 4
    $region17: #{tpu_custom_call.1} parent=1 // pred_fallthru
      _
    // Predicated region
    $region18: #{tpu_custom_call.1} parent=1 // pred_check
      _
    $region19: #{tpu_custom_call.1} parent=1 // pred_check_branch
      %55 = sbr.rel (0) target = $region21
    $region20: #{tpu_custom_call.1} parent=1 // pred_region
      _
    $region21: #{tpu_custom_call.1} parent=1 // pred_fallthru
      _
    // Predicated region
    $region22: #{tpu_custom_call.1} parent=1 // pred_check
      _
    $region23: #{tpu_custom_call.1} parent=1 // pred_check_branch
      %57 = sbr.rel (0) target = $region25
    $region24: #{tpu_custom_call.1} parent=1 // pred_region
      %s59 = ssub.s32 1024, 1024
      %60 = vsyncadd [#allocation9], %s59
      %s61 = sshll.u32 [#allocation8], 4
      %s62 = int_to_ptr.vmem [resolvable:$true] %s61
      %67 = dma.hbm_to_vmem [thread:$0]  %s5, 1024, %s62, [#allocation9], 64, 64, 4
    $region25: #{tpu_custom_call.1} parent=1 // pred_fallthru
      _
    // Predicated region
    $region26: #{tpu_custom_call.1} parent=1 // pred_check
      _
    $region27: #{tpu_custom_call.1} parent=1 // pred_check_branch
      %69 = sbr.rel (0) target = $region29
    $region28: #{tpu_custom_call.1} parent=1 // pred_region
      _
    $region29: #{tpu_custom_call.1} parent=1 // pred_fallthru
      _
    // Predicated region
    $region30: #{tpu_custom_call.1} parent=1 // pred_check
      _
    $region31: #{tpu_custom_call.1} parent=1 // pred_check_branch
      %71 = sbr.rel (0) target = $region33
    $region32: #{tpu_custom_call.1} parent=1 // pred_region
      %s73 = ssub.s32 1024, 1024
      %74 = vsyncadd [#allocation9], %s73
      %s75 = sshll.u32 [#allocation10], 4
      %s76 = int_to_ptr.vmem [resolvable:$true] %s75
      %81 = dma.hbm_to_vmem [thread:$0]  %s7, 1024, %s76, [#allocation9], 64, 64, 4
    $region33: #{tpu_custom_call.1} parent=1 // pred_fallthru
      _
    // Predicated region
    $region34: #{tpu_custom_call.1} parent=1 // pred_check
      _
    $region35: #{tpu_custom_call.1} parent=1 // pred_check_branch
      %83 = sbr.rel (0) target = $region37
    $region36: #{tpu_custom_call.1} parent=1 // pred_region
      _
    $region37: #{tpu_custom_call.1} parent=1 // pred_fallthru
      _
    // Predicated region
    $region38: #{tpu_custom_call.1} parent=1 // pred_check
      _
    $region39: #{tpu_custom_call.1} parent=1 // pred_check_branch
      %85 = sbr.rel (0) target = $region41
    $region40: #{tpu_custom_call.1} parent=1 // pred_region
      %86 = dma.done [#allocation3], 640
    $region41: #{tpu_custom_call.1} parent=1 // pred_fallthru
      _
    // Predicated region
    $region42: #{tpu_custom_call.1} parent=1 // pred_check
      _
    $region43: #{tpu_custom_call.1} parent=1 // pred_check_branch
      %88 = sbr.rel (0) target = $region45
    $region44: #{tpu_custom_call.1} parent=1 // pred_region
      %89 = dma.done [#allocation6], 8832
    $region45: #{tpu_custom_call.1} parent=1 // pred_fallthru
      _
    // Predicated region
    $region46: #{tpu_custom_call.1} parent=1 // pred_check
      _
    $region47: #{tpu_custom_call.1} parent=1 // pred_check_branch
      %91 = sbr.rel (0) target = $region49
    $region48: #{tpu_custom_call.1} parent=1 // pred_region
      %92 = dma.done [#allocation6], 2048
    $region49: #{tpu_custom_call.1} parent=1 // pred_fallthru
      _
    // Predicated region
    $region50: #{tpu_custom_call.1} parent=1 // pred_check
      _
    $region51: #{tpu_custom_call.1} parent=1 // pred_check_branch
      %94 = sbr.rel (0) target = $region53
    $region52: #{tpu_custom_call.1} parent=1 // pred_region
      %95 = dma.done [#allocation9], 1024
    $region53: #{tpu_custom_call.1} parent=1 // pred_fallthru
      _
    // Predicated region
    $region54: #{tpu_custom_call.1} parent=1 // pred_check
      _
    $region55: #{tpu_custom_call.1} parent=1 // pred_check_branch
      %97 = sbr.rel (0) target = $region57
    $region56: #{tpu_custom_call.1} parent=1 // pred_region
      %98 = dma.done [#allocation9], 1024
    $region57: #{tpu_custom_call.1} parent=1 // pred_fallthru
      _
    %v100 = vld [vmem:[#allocation2] sm:$0xff]
    %v101 = vld [vmem:[#allocation2 + $0x8] sm:$0xff]
    %v102 = vld [vmem:[#allocation2 + $0x10] sm:$0xff]
    %v103 = vld [vmem:[#allocation2 + $0x18] sm:$0xff]
    %v104 = vld [vmem:[#allocation2 + $0x20] sm:$0xff]
    %v105 = vpack.c.bf16 %v100, %v100
    %v106 = vpack.c.bf16 %v101, %v101
    %v107 = vpack.c.bf16 %v102, %v102
    %v108 = vpack.c.bf16 %v103, %v103
    %v109 = vpack.c.bf16 %v104, %v104
    %v110 = vld [vmem:[#allocation5] sm:$0xff]
    %v111 = vld [vmem:[#allocation5 + $0x8] sm:$0xff]
    %v112 = vld [vmem:[#allocation5 + $0x10] sm:$0xff]
    %v113 = vld [vmem:[#allocation5 + $0x18] sm:$0xff]
    %v114 = vld [vmem:[#allocation5 + $0x20] sm:$0xff]
    %v115 = vld [vmem:[#allocation5 + $0x28] sm:$0xff]
    %v116 = vld [vmem:[#allocation5 + $0x30] sm:$0xff]
    %v117 = vld [vmem:[#allocation5 + $0x38] sm:$0xff]
    %v118 = vld [vmem:[#allocation5 + $0x40] sm:$0xff]
    %v119 = vld [vmem:[#allocation5 + $0x48] sm:$0xff]
    %v120 = vld [vmem:[#allocation5 + $0x50] sm:$0xff]
    %v121 = vld [vmem:[#allocation5 + $0x58] sm:$0xff]
    %v122 = vld [vmem:[#allocation5 + $0x60] sm:$0xff]
    %v123 = vld [vmem:[#allocation5 + $0x68] sm:$0xff]
    %v124 = vld [vmem:[#allocation5 + $0x70] sm:$0xff]
    %v125 = vld [vmem:[#allocation5 + $0x78] sm:$0xff]
    %v126 = vld [vmem:[#allocation5 + $0x80] sm:$0xff]
    %v127 = vld [vmem:[#allocation5 + $0x88] sm:$0xff]
    %v128 = vld [vmem:[#allocation5 + $0x90] sm:$0xff]
    %v129 = vld [vmem:[#allocation5 + $0x98] sm:$0xff]
    %v130 = vld [vmem:[#allocation5 + $0xa0] sm:$0xff]
    %v131 = vld [vmem:[#allocation5 + $0xa8] sm:$0xff]
    %v132 = vld [vmem:[#allocation5 + $0xb0] sm:$0xff]
    %v133 = vld [vmem:[#allocation5 + $0xb8] sm:$0xff]
    %v134 = vld [vmem:[#allocation5 + $0xc0] sm:$0xff]
    %v135 = vld [vmem:[#allocation5 + $0xc8] sm:$0xff]
    %v136 = vld [vmem:[#allocation5 + $0xd0] sm:$0xff]
    %v137 = vld [vmem:[#allocation5 + $0xd8] sm:$0xff]
    %v138 = vld [vmem:[#allocation5 + $0xe0] sm:$0xff]
    %v139 = vld [vmem:[#allocation5 + $0xe8] sm:$0xff]
    %v140 = vld [vmem:[#allocation5 + $0xf0] sm:$0xff]
    %v141 = vld [vmem:[#allocation5 + $0xf8] sm:$0xff]
    %v142 = vld [vmem:[#allocation5 + $0x100] sm:$0xff]
    %v143 = vld [vmem:[#allocation5 + $0x108] sm:$0xff]
    %v144 = vld [vmem:[#allocation5 + $0x110] sm:$0xff]
    %v145 = vld [vmem:[#allocation5 + $0x118] sm:$0xff]
    %v146 = vld [vmem:[#allocation5 + $0x120] sm:$0xff]
    %v147 = vld [vmem:[#allocation5 + $0x128] sm:$0xff]
    %v148 = vld [vmem:[#allocation5 + $0x130] sm:$0xff]
    %v149 = vld [vmem:[#allocation5 + $0x138] sm:$0xff]
    %v150 = vld [vmem:[#allocation5 + $0x140] sm:$0xff]
    %v151 = vld [vmem:[#allocation5 + $0x148] sm:$0xff]
    %v152 = vld [vmem:[#allocation5 + $0x150] sm:$0xff]
    %v153 = vld [vmem:[#allocation5 + $0x158] sm:$0xff]
    %v154 = vld [vmem:[#allocation5 + $0x160] sm:$0xff]
    %v155 = vld [vmem:[#allocation5 + $0x168] sm:$0xff]
    %v156 = vld [vmem:[#allocation5 + $0x170] sm:$0xff]
    %v157 = vld [vmem:[#allocation5 + $0x178] sm:$0xff]
    %v158 = vld [vmem:[#allocation5 + $0x180] sm:$0xff]
    %v159 = vld [vmem:[#allocation5 + $0x188] sm:$0xff]
    %v160 = vld [vmem:[#allocation5 + $0x190] sm:$0xff]
    %v161 = vld [vmem:[#allocation5 + $0x198] sm:$0xff]
    %v162 = vld [vmem:[#allocation5 + $0x1a0] sm:$0xff]
    %v163 = vld [vmem:[#allocation5 + $0x1a8] sm:$0xff]
    %v164 = vld [vmem:[#allocation5 + $0x1b0] sm:$0xff]
    %v165 = vld [vmem:[#allocation5 + $0x1b8] sm:$0xff]
    %v166 = vld [vmem:[#allocation5 + $0x1c0] sm:$0xff]
    %v167 = vld [vmem:[#allocation5 + $0x1c8] sm:$0xff]
    %v168 = vld [vmem:[#allocation5 + $0x1d0] sm:$0xff]
    %v169 = vld [vmem:[#allocation5 + $0x1d8] sm:$0xff]
    %v170 = vld [vmem:[#allocation5 + $0x1e0] sm:$0xff]
    %v171 = vld [vmem:[#allocation5 + $0x1e8] sm:$0xff]
    %v172 = vld [vmem:[#allocation5 + $0x1f0] sm:$0xff]
    %v173 = vld [vmem:[#allocation5 + $0x1f8] sm:$0xff]
    %v174 = vld [vmem:[#allocation5 + $0x200] sm:$0xff]
    %v175 = vld [vmem:[#allocation5 + $0x208] sm:$0xff]
    %v176 = vld [vmem:[#allocation5 + $0x210] sm:$0xff]
    %v177 = vld [vmem:[#allocation5 + $0x218] sm:$0xff]
    %v178 = vld [vmem:[#allocation5 + $0x220] sm:$0x77]
    %v179 = vld [vmem:[%s2] sm:$0x3]
    %v181 = vlaneseq
    %v182 = vshrl.u32 %v181, 7
    %v183 = vsub.s32 0, %v182
    %v184 = vrot.slane %v179, %v183
    %v185 = vlaneseq
    %v186 = vshrl.u32 %v185, 7
    %v187 = vsub.s32 1, %v186
    %v188 = vrot.slane %v179, %v187
    %v260 = vunpack.c.l.b16 %v110
    %v261 = vunpack.c.h.b16 %v110
    %v262 = vunpack.c.l.b16 %v111
    %v263 = vunpack.c.h.b16 %v111
    %v264 = vunpack.c.l.b16 %v112
    %v265 = vunpack.c.h.b16 %v112
    %v266 = vunpack.c.l.b16 %v113
    %v267 = vunpack.c.h.b16 %v113
    %v268 = vunpack.c.l.b16 %v114
    %v269 = vunpack.c.h.b16 %v114
    %v270 = vunpack.c.l.b16 %v115
    %v271 = vunpack.c.h.b16 %v115
    %v272 = vunpack.c.l.b16 %v116
    %v273 = vunpack.c.h.b16 %v116
    %v274 = vunpack.c.l.b16 %v117
    %v275 = vunpack.c.h.b16 %v117
    %v276 = vunpack.c.l.b16 %v118
    %v277 = vunpack.c.h.b16 %v118
    %v278 = vunpack.c.l.b16 %v119
    %v279 = vunpack.c.h.b16 %v119
    %v280 = vunpack.c.l.b16 %v120
    %v281 = vunpack.c.h.b16 %v120
    %v282 = vunpack.c.l.b16 %v121
    %v283 = vunpack.c.h.b16 %v121
    %v284 = vunpack.c.l.b16 %v122
    %v285 = vunpack.c.h.b16 %v122
    %v286 = vunpack.c.l.b16 %v123
    %v287 = vunpack.c.h.b16 %v123
    %v288 = vunpack.c.l.b16 %v124
    %v289 = vunpack.c.h.b16 %v124
    %v290 = vunpack.c.l.b16 %v125
    %v291 = vunpack.c.h.b16 %v125
    %v292 = vunpack.c.l.b16 %v126
    %v293 = vunpack.c.h.b16 %v126
    %v294 = vunpack.c.l.b16 %v127
    %v295 = vunpack.c.h.b16 %v127
    %v296 = vunpack.c.l.b16 %v128
    %v297 = vunpack.c.h.b16 %v128
    %v298 = vunpack.c.l.b16 %v129
    %v299 = vunpack.c.h.b16 %v129
    %v300 = vunpack.c.l.b16 %v130
    %v301 = vunpack.c.h.b16 %v130
    %v302 = vunpack.c.l.b16 %v131
    %v303 = vunpack.c.h.b16 %v131
    %v304 = vunpack.c.l.b16 %v132
    %v305 = vunpack.c.h.b16 %v132
    %v306 = vunpack.c.l.b16 %v133
    %v307 = vunpack.c.h.b16 %v133
    %v308 = vunpack.c.l.b16 %v134
    %v309 = vunpack.c.h.b16 %v134
    %v310 = vunpack.c.l.b16 %v135
    %v311 = vunpack.c.h.b16 %v135
    %v312 = vunpack.c.l.b16 %v136
    %v313 = vunpack.c.h.b16 %v136
    %v314 = vunpack.c.l.b16 %v137
    %v315 = vunpack.c.h.b16 %v137
    %v316 = vunpack.c.l.b16 %v138
    %v317 = vunpack.c.h.b16 %v138
    %v318 = vunpack.c.l.b16 %v139
    %v319 = vunpack.c.h.b16 %v139
    %v320 = vunpack.c.l.b16 %v140
    %v321 = vunpack.c.h.b16 %v140
    %v322 = vunpack.c.l.b16 %v141
    %v323 = vunpack.c.h.b16 %v141
    %v324 = vunpack.c.l.b16 %v142
    %v325 = vunpack.c.h.b16 %v142
    %v326 = vunpack.c.l.b16 %v143
    %v327 = vunpack.c.h.b16 %v143
    %v328 = vunpack.c.l.b16 %v144
    %v329 = vunpack.c.h.b16 %v144
    %v330 = vunpack.c.l.b16 %v145
    %v331 = vunpack.c.h.b16 %v145
    %v332 = vunpack.c.l.b16 %v146
    %v333 = vunpack.c.h.b16 %v146
    %v334 = vunpack.c.l.b16 %v147
    %v335 = vunpack.c.h.b16 %v147
    %v336 = vunpack.c.l.b16 %v148
    %v337 = vunpack.c.h.b16 %v148
    %v338 = vunpack.c.l.b16 %v149
    %v339 = vunpack.c.h.b16 %v149
    %v340 = vunpack.c.l.b16 %v150
    %v341 = vunpack.c.h.b16 %v150
    %v342 = vunpack.c.l.b16 %v151
    %v343 = vunpack.c.h.b16 %v151
    %v344 = vunpack.c.l.b16 %v152
    %v345 = vunpack.c.h.b16 %v152
    %v346 = vunpack.c.l.b16 %v153
    %v347 = vunpack.c.h.b16 %v153
    %v348 = vunpack.c.l.b16 %v154
    %v349 = vunpack.c.h.b16 %v154
    %v350 = vunpack.c.l.b16 %v155
    %v351 = vunpack.c.h.b16 %v155
    %v352 = vunpack.c.l.b16 %v156
    %v353 = vunpack.c.h.b16 %v156
    %v354 = vunpack.c.l.b16 %v157
    %v355 = vunpack.c.h.b16 %v157
    %v356 = vunpack.c.l.b16 %v158
    %v357 = vunpack.c.h.b16 %v158
    %v358 = vunpack.c.l.b16 %v159
    %v359 = vunpack.c.h.b16 %v159
    %v360 = vunpack.c.l.b16 %v160
    %v361 = vunpack.c.h.b16 %v160
    %v362 = vunpack.c.l.b16 %v161
    %v363 = vunpack.c.h.b16 %v161
    %v364 = vunpack.c.l.b16 %v162
    %v365 = vunpack.c.h.b16 %v162
    %v366 = vunpack.c.l.b16 %v163
    %v367 = vunpack.c.h.b16 %v163
    %v368 = vunpack.c.l.b16 %v164
    %v369 = vunpack.c.h.b16 %v164
    %v370 = vunpack.c.l.b16 %v165
    %v371 = vunpack.c.h.b16 %v165
    %v372 = vunpack.c.l.b16 %v166
    %v373 = vunpack.c.h.b16 %v166
    %v374 = vunpack.c.l.b16 %v167
    %v375 = vunpack.c.h.b16 %v167
    %v376 = vunpack.c.l.b16 %v168
    %v377 = vunpack.c.h.b16 %v168
    %v378 = vunpack.c.l.b16 %v169
    %v379 = vunpack.c.h.b16 %v169
    %v380 = vunpack.c.l.b16 %v170
    %v381 = vunpack.c.h.b16 %v170
    %v382 = vunpack.c.l.b16 %v171
    %v383 = vunpack.c.h.b16 %v171
    %v384 = vunpack.c.l.b16 %v172
    %v385 = vunpack.c.h.b16 %v172
    %v386 = vunpack.c.l.b16 %v173
    %v387 = vunpack.c.h.b16 %v173
    %v388 = vunpack.c.l.b16 %v174
    %v389 = vunpack.c.h.b16 %v174
    %v390 = vunpack.c.l.b16 %v175
    %v391 = vunpack.c.h.b16 %v175
    %v392 = vunpack.c.l.b16 %v176
    %v393 = vunpack.c.h.b16 %v176
    %v394 = vunpack.c.l.b16 %v177
    %v395 = vunpack.c.h.b16 %v177
    %v396 = vunpack.c.l.b16 %v178
    %v397 = vunpack.c.h.b16 %v178
    %v398 = vpack.c.b16 %v262, %v260
    %v399 = vpack.c.b16 %v263, %v261
    %v400 = vpack.c.b16 %v266, %v264
    %v401 = vpack.c.b16 %v267, %v265
    %v402 = vpack.c.b16 %v270, %v268
    %v403 = vpack.c.b16 %v271, %v269
    %v404 = vpack.c.b16 %v274, %v272
    %v405 = vpack.c.b16 %v275, %v273
    %v406 = vpack.c.b16 %v278, %v276
    %v407 = vpack.c.b16 %v279, %v277
    %v408 = vpack.c.b16 %v282, %v280
    %v409 = vpack.c.b16 %v283, %v281
    %v410 = vpack.c.b16 %v286, %v284
    %v411 = vpack.c.b16 %v287, %v285
    %v412 = vpack.c.b16 %v290, %v288
    %v413 = vpack.c.b16 %v291, %v289
    %v414 = vpack.c.b16 %v294, %v292
    %v415 = vpack.c.b16 %v295, %v293
    %v416 = vpack.c.b16 %v298, %v296
    %v417 = vpack.c.b16 %v299, %v297
    %v418 = vpack.c.b16 %v302, %v300
    %v419 = vpack.c.b16 %v303, %v301
    %v420 = vpack.c.b16 %v306, %v304
    %v421 = vpack.c.b16 %v307, %v305
    %v422 = vpack.c.b16 %v310, %v308
    %v423 = vpack.c.b16 %v311, %v309
    %v424 = vpack.c.b16 %v314, %v312
    %v425 = vpack.c.b16 %v315, %v313
    %v426 = vpack.c.b16 %v318, %v316
    %v427 = vpack.c.b16 %v319, %v317
    %v428 = vpack.c.b16 %v322, %v320
    %v429 = vpack.c.b16 %v323, %v321
    %v430 = vpack.c.b16 %v326, %v324
    %v431 = vpack.c.b16 %v327, %v325
    %v432 = vpack.c.b16 %v330, %v328
    %v433 = vpack.c.b16 %v331, %v329
    %v434 = vpack.c.b16 %v334, %v332
    %v435 = vpack.c.b16 %v335, %v333
    %v436 = vpack.c.b16 %v338, %v336
    %v437 = vpack.c.b16 %v339, %v337
    %v438 = vpack.c.b16 %v342, %v340
    %v439 = vpack.c.b16 %v343, %v341
    %v440 = vpack.c.b16 %v346, %v344
    %v441 = vpack.c.b16 %v347, %v345
    %v442 = vpack.c.b16 %v350, %v348
    %v443 = vpack.c.b16 %v351, %v349
    %v444 = vpack.c.b16 %v354, %v352
    %v445 = vpack.c.b16 %v355, %v353
    %v446 = vpack.c.b16 %v358, %v356
    %v447 = vpack.c.b16 %v359, %v357
    %v448 = vpack.c.b16 %v362, %v360
    %v449 = vpack.c.b16 %v363, %v361
    %v450 = vpack.c.b16 %v366, %v364
    %v451 = vpack.c.b16 %v367, %v365
    %v452 = vpack.c.b16 %v370, %v368
    %v453 = vpack.c.b16 %v371, %v369
    %v454 = vpack.c.b16 %v374, %v372
    %v455 = vpack.c.b16 %v375, %v373
    %v456 = vpack.c.b16 %v378, %v376
    %v457 = vpack.c.b16 %v379, %v377
    %v458 = vpack.c.b16 %v382, %v380
    %v459 = vpack.c.b16 %v383, %v381
    %v460 = vpack.c.b16 %v386, %v384
    %v461 = vpack.c.b16 %v387, %v385
    %v462 = vpack.c.b16 %v390, %v388
    %v463 = vpack.c.b16 %v391, %v389
    %v464 = vpack.c.b16 %v394, %v392
    %v465 = vpack.c.b16 %v395, %v393
    %v466 = vpack.c.b16 %v396, %v396
    %v467 = vpack.c.b16 %v397, %v397
    %vm536 = vcmask 302080
    %v538 = vsel %vm536, %v109, 0
    %vm540 = vcmask 1041408
    %vm541 = vcmask 1042432
    %v542 = vsel %vm540, 4294967295, 65535
    %v543 = vsel %vm541, %v542, 0
    %v545 = vand.u32 %v466, %v543
    %v548 = vand.u32 %v467, %v543
    %550 = vmatprep.subr.bf16.mxu0 %v413
    %551 = vmatpush1.bf16.msra.mxu0 %v412
    %552 = vmatprep.subr.bf16.mxu0 %v411
    %553 = vmatpush1.bf16.msra.mxu0 %v410
    %554 = vmatprep.subr.bf16.mxu0 %v409
    %555 = vmatpush1.bf16.msra.mxu0 %v408
    %556 = vmatprep.subr.bf16.mxu0 %v407
    %557 = vmatpush1.bf16.msra.mxu0 %v406
    %558 = vmatprep.subr.bf16.mxu0 %v405
    %559 = vmatpush1.bf16.msra.mxu0 %v404
    %560 = vmatprep.subr.bf16.mxu0 %v403
    %561 = vmatpush1.bf16.msra.mxu0 %v402
    %562 = vmatprep.subr.bf16.mxu0 %v401
    %563 = vmatpush1.bf16.msra.mxu0 %v400
    %564 = vmatprep.subr.bf16.mxu0 %v399
    %565 = vmatpush1.bf16.msra.mxu0 %v398
    %566 = vmatprep.subr.bf16.mxu0 %v429
    %567 = vmatpush2.bf16.msra.mxu0 %v428
    %568 = vmatprep.subr.bf16.mxu0 %v427
    %569 = vmatpush2.bf16.msra.mxu0 %v426
    %570 = vmatprep.subr.bf16.mxu0 %v425
    %571 = vmatpush2.bf16.msra.mxu0 %v424
    %572 = vmatprep.subr.bf16.mxu0 %v423
    %573 = vmatpush2.bf16.msra.mxu0 %v422
    %574 = vmatprep.subr.bf16.mxu0 %v421
    %575 = vmatpush2.bf16.msra.mxu0 %v420
    %576 = vmatprep.subr.bf16.mxu0 %v419
    %577 = vmatpush2.bf16.msra.mxu0 %v418
    %578 = vmatprep.subr.bf16.mxu0 %v417
    %579 = vmatpush2.bf16.msra.mxu0 %v416
    %580 = vmatprep.subr.bf16.mxu0 %v415
    %581 = vmatpush2.bf16.msra.mxu0 %v414
    %582 = vmatprep.mubr.bf16.mxu0 %v106
    %583 = vmatmul.mubr.bf16.gmra.mxu0 %v105
    %v584 = vpop.f32.mrf.mxu0
    %v585 = vadd.f32 %v184, %v584
    %v586 = vpop.f32.mrf.mxu0
    %v587 = vadd.f32 %v188, %v586
    %v588 = vpop.f32.mrf.mxu0
    %v589 = vpop.f32.mrf.mxu0
    %590 = vdwg.mxu0
    %591 = vmatprep.subr.bf16.mxu0 %v445
    %592 = vmatpush1.bf16.msra.mxu0 %v444
    %593 = vmatprep.subr.bf16.mxu0 %v443
    %594 = vmatpush1.bf16.msra.mxu0 %v442
    %595 = vmatprep.subr.bf16.mxu0 %v441
    %596 = vmatpush1.bf16.msra.mxu0 %v440
    %597 = vmatprep.subr.bf16.mxu0 %v439
    %598 = vmatpush1.bf16.msra.mxu0 %v438
    %599 = vmatprep.subr.bf16.mxu0 %v437
    %600 = vmatpush1.bf16.msra.mxu0 %v436
    %601 = vmatprep.subr.bf16.mxu0 %v435
    %602 = vmatpush1.bf16.msra.mxu0 %v434
    %603 = vmatprep.subr.bf16.mxu0 %v433
    %604 = vmatpush1.bf16.msra.mxu0 %v432
    %605 = vmatprep.subr.bf16.mxu0 %v431
    %606 = vmatpush1.bf16.msra.mxu0 %v430
    %607 = vmatprep.subr.bf16.mxu0 %v461
    %608 = vmatpush2.bf16.msra.mxu0 %v460
    %609 = vmatprep.subr.bf16.mxu0 %v459
    %610 = vmatpush2.bf16.msra.mxu0 %v458
    %611 = vmatprep.subr.bf16.mxu0 %v457
    %612 = vmatpush2.bf16.msra.mxu0 %v456
    %613 = vmatprep.subr.bf16.mxu0 %v455
    %614 = vmatpush2.bf16.msra.mxu0 %v454
    %615 = vmatprep.subr.bf16.mxu0 %v453
    %616 = vmatpush2.bf16.msra.mxu0 %v452
    %617 = vmatprep.subr.bf16.mxu0 %v451
    %618 = vmatpush2.bf16.msra.mxu0 %v450
    %619 = vmatprep.subr.bf16.mxu0 %v449
    %620 = vmatpush2.bf16.msra.mxu0 %v448
    %621 = vmatprep.subr.bf16.mxu0 %v447
    %622 = vmatpush2.bf16.msra.mxu0 %v446
    %623 = vmatprep.mubr.bf16.mxu0 %v108
    %624 = vmatmul.mubr.bf16.gmra.mxu0 %v107
    %v625 = vpop.f32.mrf.mxu0
    %v626 = vadd.f32 %v585, %v625
    %v627 = vpop.f32.mrf.mxu0
    %v628 = vadd.f32 %v587, %v627
    %v629 = vpop.f32.mrf.mxu0
    %v630 = vpop.f32.mrf.mxu0
    %631 = vdwg.mxu0
    %632 = vmatprep.subr.bf16.mxu0 0
    %633 = vmatpush1.bf16.msra.mxu0 0
    %634 = vmatprep.subr.bf16.mxu0 0
    %635 = vmatpush1.bf16.msra.mxu0 0
    %636 = vmatprep.subr.bf16.mxu0 0
    %637 = vmatpush1.bf16.msra.mxu0 0
    %638 = vmatprep.subr.bf16.mxu0 0
    %639 = vmatpush1.bf16.msra.mxu0 0
    %640 = vmatprep.subr.bf16.mxu0 0
    %641 = vmatpush1.bf16.msra.mxu0 0
    %642 = vmatprep.subr.bf16.mxu0 %v548
    %643 = vmatpush1.bf16.msra.mxu0 %v545
    %644 = vmatprep.subr.bf16.mxu0 %v465
    %645 = vmatpush1.bf16.msra.mxu0 %v464
    %646 = vmatprep.subr.bf16.mxu0 %v463
    %647 = vmatpush1.bf16.msra.mxu0 %v462
    %648 = vmatprep.subr.bf16.mxu0 0
    %649 = vmatpush2.bf16.msra.mxu0 0
    %650 = vmatprep.subr.bf16.mxu0 0
    %651 = vmatpush2.bf16.msra.mxu0 0
    %652 = vmatprep.subr.bf16.mxu0 0
    %653 = vmatpush2.bf16.msra.mxu0 0
    %654 = vmatprep.subr.bf16.mxu0 0
    %655 = vmatpush2.bf16.msra.mxu0 0
    %656 = vmatprep.subr.bf16.mxu0 0
    %657 = vmatpush2.bf16.msra.mxu0 0
    %658 = vmatprep.subr.bf16.mxu0 0
    %659 = vmatpush2.bf16.msra.mxu0 0
    %660 = vmatprep.subr.bf16.mxu0 0
    %661 = vmatpush2.bf16.msra.mxu0 0
    %662 = vmatprep.subr.bf16.mxu0 0
    %663 = vmatpush2.bf16.msra.mxu0 0
    %664 = vmatprep.mubr.bf16.mxu0 0
    %665 = vmatmul.mubr.bf16.gmra.mxu0 %v538
    %v666 = vpop.f32.mrf.mxu0
    %v667 = vadd.f32 %v626, %v666
    %v668 = vpop.f32.mrf.mxu0
    %v669 = vadd.f32 %v628, %v668
    %v670 = vpop.f32.mrf.mxu0
    %v671 = vpop.f32.mrf.mxu0
    %672 = vdwg.mxu0
    %v673 = vmul.f32 %v667, 0.5
    %v674 = vmul.f32 %v669, 0.5
    %v675 = vmul.f32 %v667, 0.70710677
    %v676 = vmul.f32 %v669, 0.70710677
    %v677 = verf.f32.pop %v675
    %v678 = verf.f32.pop %v676
    %v679 = vadd.f32 %v677, 1.0
    %v680 = vadd.f32 %v678, 1.0
    %v681 = vmul.f32 %v673, %v679
    %v682 = vmul.f32 %v674, %v680
    %v683 = vpack.c.bf16 %v681, %v681
    %v684 = vpack.c.bf16 %v682, %v682
    %v685 = vld [vmem:[#allocation7] sm:$0xf]
    %v686 = vld [vmem:[#allocation7 + $0x4] sm:$0xf]
    %v687 = vld [vmem:[#allocation7 + $0x8] sm:$0xf]
    %v688 = vld [vmem:[#allocation7 + $0xc] sm:$0xf]
    %v689 = vld [vmem:[#allocation7 + $0x10] sm:$0xf]
    %v690 = vld [vmem:[#allocation7 + $0x14] sm:$0xf]
    %v691 = vld [vmem:[#allocation7 + $0x18] sm:$0xf]
    %v692 = vld [vmem:[#allocation7 + $0x1c] sm:$0xf]
    %v693 = vld [vmem:[#allocation7 + $0x20] sm:$0xf]
    %v694 = vld [vmem:[#allocation7 + $0x24] sm:$0xf]
    %v695 = vld [vmem:[#allocation7 + $0x28] sm:$0xf]
    %v696 = vld [vmem:[#allocation7 + $0x2c] sm:$0xf]
    %v697 = vld [vmem:[#allocation7 + $0x30] sm:$0xf]
    %v698 = vld [vmem:[#allocation7 + $0x34] sm:$0xf]
    %v699 = vld [vmem:[#allocation7 + $0x38] sm:$0xf]
    %v700 = vld [vmem:[#allocation7 + $0x3c] sm:$0xf]
    %v701 = vld [vmem:[#allocation7 + $0x40] sm:$0xf]
    %v702 = vld [vmem:[#allocation7 + $0x44] sm:$0xf]
    %v703 = vld [vmem:[#allocation7 + $0x48] sm:$0xf]
    %v704 = vld [vmem:[#allocation7 + $0x4c] sm:$0xf]
    %v705 = vld [vmem:[#allocation7 + $0x50] sm:$0xf]
    %v706 = vld [vmem:[#allocation7 + $0x54] sm:$0xf]
    %v707 = vld [vmem:[#allocation7 + $0x58] sm:$0xf]
    %v708 = vld [vmem:[#allocation7 + $0x5c] sm:$0xf]
    %v709 = vld [vmem:[#allocation7 + $0x60] sm:$0xf]
    %v710 = vld [vmem:[#allocation7 + $0x64] sm:$0xf]
    %v711 = vld [vmem:[#allocation7 + $0x68] sm:$0xf]
    %v712 = vld [vmem:[#allocation7 + $0x6c] sm:$0xf]
    %v713 = vld [vmem:[#allocation7 + $0x70] sm:$0xf]
    %v714 = vld [vmem:[#allocation7 + $0x74] sm:$0xf]
    %v715 = vld [vmem:[#allocation7 + $0x78] sm:$0xf]
    %v716 = vld [vmem:[#allocation7 + $0x7c] sm:$0xf]
    %v717 = vld [vmem:[%s4] sm:$0x1]
    %v719 = vlaneseq
    %v720 = vshrl.u32 %v719, 7
    %v721 = vsub.s32 0, %v720
    %v722 = vrot.slane %v717, %v721
    %v756 = vunpack.c.l.b16 %v685
    %v757 = vunpack.c.l.b16 %v686
    %v758 = vunpack.c.l.b16 %v687
    %v759 = vunpack.c.l.b16 %v688
    %v760 = vunpack.c.l.b16 %v689
    %v761 = vunpack.c.l.b16 %v690
    %v762 = vunpack.c.l.b16 %v691
    %v763 = vunpack.c.l.b16 %v692
    %v764 = vunpack.c.l.b16 %v693
    %v765 = vunpack.c.l.b16 %v694
    %v766 = vunpack.c.l.b16 %v695
    %v767 = vunpack.c.l.b16 %v696
    %v768 = vunpack.c.l.b16 %v697
    %v769 = vunpack.c.l.b16 %v698
    %v770 = vunpack.c.l.b16 %v699
    %v771 = vunpack.c.l.b16 %v700
    %v772 = vunpack.c.l.b16 %v701
    %v773 = vunpack.c.l.b16 %v702
    %v774 = vunpack.c.l.b16 %v703
    %v775 = vunpack.c.l.b16 %v704
    %v776 = vunpack.c.l.b16 %v705
    %v777 = vunpack.c.l.b16 %v706
    %v778 = vunpack.c.l.b16 %v707
    %v779 = vunpack.c.l.b16 %v708
    %v780 = vunpack.c.l.b16 %v709
    %v781 = vunpack.c.l.b16 %v710
    %v782 = vunpack.c.l.b16 %v711
    %v783 = vunpack.c.l.b16 %v712
    %v784 = vunpack.c.l.b16 %v713
    %v785 = vunpack.c.l.b16 %v714
    %v786 = vunpack.c.l.b16 %v715
    %v787 = vunpack.c.l.b16 %v716
    %v788 = vpack.c.b16 %v757, %v756
    %v789 = vpack.c.b16 %v759, %v758
    %v790 = vpack.c.b16 %v761, %v760
    %v791 = vpack.c.b16 %v763, %v762
    %v792 = vpack.c.b16 %v765, %v764
    %v793 = vpack.c.b16 %v767, %v766
    %v794 = vpack.c.b16 %v769, %v768
    %v795 = vpack.c.b16 %v771, %v770
    %v796 = vpack.c.b16 %v773, %v772
    %v797 = vpack.c.b16 %v775, %v774
    %v798 = vpack.c.b16 %v777, %v776
    %v799 = vpack.c.b16 %v779, %v778
    %v800 = vpack.c.b16 %v781, %v780
    %v801 = vpack.c.b16 %v783, %v782
    %v802 = vpack.c.b16 %v785, %v784
    %v803 = vpack.c.b16 %v787, %v786
    %820 = vmatprep.subr.bf16.mxu0 0
    %821 = vmatpush1.bf16.msra.mxu0 %v795
    %822 = vmatprep.subr.bf16.mxu0 0
    %823 = vmatpush1.bf16.msra.mxu0 %v794
    %824 = vmatprep.subr.bf16.mxu0 0
    %825 = vmatpush1.bf16.msra.mxu0 %v793
    %826 = vmatprep.subr.bf16.mxu0 0
    %827 = vmatpush1.bf16.msra.mxu0 %v792
    %828 = vmatprep.subr.bf16.mxu0 0
    %829 = vmatpush1.bf16.msra.mxu0 %v791
    %830 = vmatprep.subr.bf16.mxu0 0
    %831 = vmatpush1.bf16.msra.mxu0 %v790
    %832 = vmatprep.subr.bf16.mxu0 0
    %833 = vmatpush1.bf16.msra.mxu0 %v789
    %834 = vmatprep.subr.bf16.mxu0 0
    %835 = vmatpush1.bf16.msra.mxu0 %v788
    %836 = vmatprep.subr.bf16.mxu0 0
    %837 = vmatpush2.bf16.msra.mxu0 %v803
    %838 = vmatprep.subr.bf16.mxu0 0
    %839 = vmatpush2.bf16.msra.mxu0 %v802
    %840 = vmatprep.subr.bf16.mxu0 0
    %841 = vmatpush2.bf16.msra.mxu0 %v801
    %842 = vmatprep.subr.bf16.mxu0 0
    %843 = vmatpush2.bf16.msra.mxu0 %v800
    %844 = vmatprep.subr.bf16.mxu0 0
    %845 = vmatpush2.bf16.msra.mxu0 %v799
    %846 = vmatprep.subr.bf16.mxu0 0
    %847 = vmatpush2.bf16.msra.mxu0 %v798
    %848 = vmatprep.subr.bf16.mxu0 0
    %849 = vmatpush2.bf16.msra.mxu0 %v797
    %850 = vmatprep.subr.bf16.mxu0 0
    %851 = vmatpush2.bf16.msra.mxu0 %v796
    %852 = vmatprep.mubr.bf16.mxu0 %v684
    %853 = vmatmul.mubr.bf16.gmra.mxu0 %v683
    %v854 = vpop.f32.mrf.mxu0
    %v855 = vadd.f32 %v722, %v854
    %v856 = vpop.f32.mrf.mxu0
    %v857 = vpop.f32.mrf.mxu0
    %v858 = vpop.f32.mrf.mxu0
    %859 = vdwg.mxu0
    %v860 = vmul.f32 %v855, 0.5
    %v861 = vmul.f32 %v855, 0.70710677
    %v862 = verf.f32.pop %v861
    %v863 = vadd.f32 %v862, 1.0
    %v864 = vmul.f32 %v860, %v863
    %v865 = vpack.c.bf16 %v864, %v864
    %v866 = vld [vmem:[#allocation8] sm:$0xf]
    %v867 = vld [vmem:[#allocation8 + $0x4] sm:$0xf]
    %v868 = vld [vmem:[#allocation8 + $0x8] sm:$0xf]
    %v869 = vld [vmem:[#allocation8 + $0xc] sm:$0xf]
    %v870 = vld [vmem:[#allocation8 + $0x10] sm:$0xf]
    %v871 = vld [vmem:[#allocation8 + $0x14] sm:$0xf]
    %v872 = vld [vmem:[#allocation8 + $0x18] sm:$0xf]
    %v873 = vld [vmem:[#allocation8 + $0x1c] sm:$0xf]
    %v874 = vld [vmem:[#allocation8 + $0x20] sm:$0xf]
    %v875 = vld [vmem:[#allocation8 + $0x24] sm:$0xf]
    %v876 = vld [vmem:[#allocation8 + $0x28] sm:$0xf]
    %v877 = vld [vmem:[#allocation8 + $0x2c] sm:$0xf]
    %v878 = vld [vmem:[#allocation8 + $0x30] sm:$0xf]
    %v879 = vld [vmem:[#allocation8 + $0x34] sm:$0xf]
    %v880 = vld [vmem:[#allocation8 + $0x38] sm:$0xf]
    %v881 = vld [vmem:[#allocation8 + $0x3c] sm:$0xf]
    %v882 = vld [vmem:[%s6] sm:$0x1]
    %v884 = vlaneseq
    %v885 = vshrl.u32 %v884, 7
    %v886 = vsub.s32 0, %v885
    %v887 = vrot.slane %v882, %v886
    %v905 = vunpack.c.l.b16 %v866
    %v906 = vunpack.c.l.b16 %v867
    %v907 = vunpack.c.l.b16 %v868
    %v908 = vunpack.c.l.b16 %v869
    %v909 = vunpack.c.l.b16 %v870
    %v910 = vunpack.c.l.b16 %v871
    %v911 = vunpack.c.l.b16 %v872
    %v912 = vunpack.c.l.b16 %v873
    %v913 = vunpack.c.l.b16 %v874
    %v914 = vunpack.c.l.b16 %v875
    %v915 = vunpack.c.l.b16 %v876
    %v916 = vunpack.c.l.b16 %v877
    %v917 = vunpack.c.l.b16 %v878
    %v918 = vunpack.c.l.b16 %v879
    %v919 = vunpack.c.l.b16 %v880
    %v920 = vunpack.c.l.b16 %v881
    %v921 = vpack.c.b16 %v906, %v905
    %v922 = vpack.c.b16 %v908, %v907
    %v923 = vpack.c.b16 %v910, %v909
    %v924 = vpack.c.b16 %v912, %v911
    %v925 = vpack.c.b16 %v914, %v913
    %v926 = vpack.c.b16 %v916, %v915
    %v927 = vpack.c.b16 %v918, %v917
    %v928 = vpack.c.b16 %v920, %v919
    %937 = vmatprep.subr.bf16.mxu0 0
    %938 = vmatpush1.bf16.msra.mxu0 %v928
    %939 = vmatprep.subr.bf16.mxu0 0
    %940 = vmatpush1.bf16.msra.mxu0 %v927
    %941 = vmatprep.subr.bf16.mxu0 0
    %942 = vmatpush1.bf16.msra.mxu0 %v926
    %943 = vmatprep.subr.bf16.mxu0 0
    %944 = vmatpush1.bf16.msra.mxu0 %v925
    %945 = vmatprep.subr.bf16.mxu0 0
    %946 = vmatpush1.bf16.msra.mxu0 %v924
    %947 = vmatprep.subr.bf16.mxu0 0
    %948 = vmatpush1.bf16.msra.mxu0 %v923
    %949 = vmatprep.subr.bf16.mxu0 0
    %950 = vmatpush1.bf16.msra.mxu0 %v922
    %951 = vmatprep.subr.bf16.mxu0 0
    %952 = vmatpush1.bf16.msra.mxu0 %v921
    %953 = vmatprep.subr.bf16.mxu0 0
    %954 = vmatpush2.bf16.msra.mxu0 0
    %955 = vmatprep.subr.bf16.mxu0 0
    %956 = vmatpush2.bf16.msra.mxu0 0
    %957 = vmatprep.subr.bf16.mxu0 0
    %958 = vmatpush2.bf16.msra.mxu0 0
    %959 = vmatprep.subr.bf16.mxu0 0
    %960 = vmatpush2.bf16.msra.mxu0 0
    %961 = vmatprep.subr.bf16.mxu0 0
    %962 = vmatpush2.bf16.msra.mxu0 0
    %963 = vmatprep.subr.bf16.mxu0 0
    %964 = vmatpush2.bf16.msra.mxu0 0
    %965 = vmatprep.subr.bf16.mxu0 0
    %966 = vmatpush2.bf16.msra.mxu0 0
    %967 = vmatprep.subr.bf16.mxu0 0
    %968 = vmatpush2.bf16.msra.mxu0 0
    %969 = vmatprep.mubr.bf16.mxu0 0
    %970 = vmatmul.mubr.bf16.gmra.mxu0 %v865
    %v971 = vpop.f32.mrf.mxu0
    %v972 = vadd.f32 %v887, %v971
    %v973 = vpop.f32.mrf.mxu0
    %v974 = vpop.f32.mrf.mxu0
    %v975 = vpop.f32.mrf.mxu0
    %976 = vdwg.mxu0
    %v977 = vmul.f32 %v972, 0.5
    %v978 = vmul.f32 %v972, 0.70710677
    %v979 = verf.f32.pop %v978
    %v980 = vadd.f32 %v979, 1.0
    %v981 = vmul.f32 %v977, %v980
    %v982 = vpack.c.bf16 %v981, %v981
    %v983 = vld [vmem:[#allocation10] sm:$0xf]
    %v984 = vld [vmem:[#allocation10 + $0x4] sm:$0xf]
    %v985 = vld [vmem:[#allocation10 + $0x8] sm:$0xf]
    %v986 = vld [vmem:[#allocation10 + $0xc] sm:$0xf]
    %v987 = vld [vmem:[#allocation10 + $0x10] sm:$0xf]
    %v988 = vld [vmem:[#allocation10 + $0x14] sm:$0xf]
    %v989 = vld [vmem:[#allocation10 + $0x18] sm:$0xf]
    %v990 = vld [vmem:[#allocation10 + $0x1c] sm:$0xf]
    %v991 = vld [vmem:[#allocation10 + $0x20] sm:$0xf]
    %v992 = vld [vmem:[#allocation10 + $0x24] sm:$0xf]
    %v993 = vld [vmem:[#allocation10 + $0x28] sm:$0xf]
    %v994 = vld [vmem:[#allocation10 + $0x2c] sm:$0xf]
    %v995 = vld [vmem:[#allocation10 + $0x30] sm:$0xf]
    %v996 = vld [vmem:[#allocation10 + $0x34] sm:$0xf]
    %v997 = vld [vmem:[#allocation10 + $0x38] sm:$0xf]
    %v998 = vld [vmem:[#allocation10 + $0x3c] sm:$0xf]
    %v999 = vld [vmem:[%s8] sm:$0x1]
    %v1001 = vlaneseq
    %v1002 = vshrl.u32 %v1001, 7
    %v1003 = vsub.s32 0, %v1002
    %v1004 = vrot.slane %v999, %v1003
    %v1022 = vunpack.c.l.b16 %v983
    %v1023 = vunpack.c.l.b16 %v984
    %v1024 = vunpack.c.l.b16 %v985
    %v1025 = vunpack.c.l.b16 %v986
    %v1026 = vunpack.c.l.b16 %v987
    %v1027 = vunpack.c.l.b16 %v988
    %v1028 = vunpack.c.l.b16 %v989
    %v1029 = vunpack.c.l.b16 %v990
    %v1030 = vunpack.c.l.b16 %v991
    %v1031 = vunpack.c.l.b16 %v992
    %v1032 = vunpack.c.l.b16 %v993
    %v1033 = vunpack.c.l.b16 %v994
    %v1034 = vunpack.c.l.b16 %v995
    %v1035 = vunpack.c.l.b16 %v996
    %v1036 = vunpack.c.l.b16 %v997
    %v1037 = vunpack.c.l.b16 %v998
    %v1038 = vpack.c.b16 %v1023, %v1022
    %v1039 = vpack.c.b16 %v1025, %v1024
    %v1040 = vpack.c.b16 %v1027, %v1026
    %v1041 = vpack.c.b16 %v1029, %v1028
    %v1042 = vpack.c.b16 %v1031, %v1030
    %v1043 = vpack.c.b16 %v1033, %v1032
    %v1044 = vpack.c.b16 %v1035, %v1034
    %v1045 = vpack.c.b16 %v1037, %v1036
    %1054 = vmatprep.subr.bf16.mxu0 0
    %1055 = vmatpush1.bf16.msra.mxu0 %v1045
    %1056 = vmatprep.subr.bf16.mxu0 0
    %1057 = vmatpush1.bf16.msra.mxu0 %v1044
    %1058 = vmatprep.subr.bf16.mxu0 0
    %1059 = vmatpush1.bf16.msra.mxu0 %v1043
    %1060 = vmatprep.subr.bf16.mxu0 0
    %1061 = vmatpush1.bf16.msra.mxu0 %v1042
    %1062 = vmatprep.subr.bf16.mxu0 0
    %1063 = vmatpush1.bf16.msra.mxu0 %v1041
    %1064 = vmatprep.subr.bf16.mxu0 0
    %1065 = vmatpush1.bf16.msra.mxu0 %v1040
    %1066 = vmatprep.subr.bf16.mxu0 0
    %1067 = vmatpush1.bf16.msra.mxu0 %v1039
    %1068 = vmatprep.subr.bf16.mxu0 0
    %1069 = vmatpush1.bf16.msra.mxu0 %v1038
    %1070 = vmatprep.subr.bf16.mxu0 0
    %1071 = vmatpush2.bf16.msra.mxu0 0
    %1072 = vmatprep.subr.bf16.mxu0 0
    %1073 = vmatpush2.bf16.msra.mxu0 0
    %1074 = vmatprep.subr.bf16.mxu0 0
    %1075 = vmatpush2.bf16.msra.mxu0 0
    %1076 = vmatprep.subr.bf16.mxu0 0
    %1077 = vmatpush2.bf16.msra.mxu0 0
    %1078 = vmatprep.subr.bf16.mxu0 0
    %1079 = vmatpush2.bf16.msra.mxu0 0
    %1080 = vmatprep.subr.bf16.mxu0 0
    %1081 = vmatpush2.bf16.msra.mxu0 0
    %1082 = vmatprep.subr.bf16.mxu0 0
    %1083 = vmatpush2.bf16.msra.mxu0 0
    %1084 = vmatprep.subr.bf16.mxu0 0
    %1085 = vmatpush2.bf16.msra.mxu0 0
    %1086 = vmatprep.mubr.bf16.mxu0 0
    %1087 = vmatmul.mubr.bf16.gmra.mxu0 %v982
    %v1088 = vpop.f32.mrf.mxu0
    %v1089 = vadd.f32 %v1004, %v1088
    %v1090 = vpop.f32.mrf.mxu0
    %v1091 = vpop.f32.mrf.mxu0
    %v1092 = vpop.f32.mrf.mxu0
    %1093 = vdwg.mxu0
    %1094 = vst [vmem:[#allocation11] sm:$0xff] %v1089
    // Predicated region
    $region58: #{tpu_custom_call.1} parent=1 // pred_check
      _
    $region59: #{tpu_custom_call.1} parent=1 // pred_check_branch
      %1096 = sbr.rel (0) target = $region61
    $region60: #{tpu_custom_call.1} parent=1 // pred_region
      %s1098 = ssub.s32 128, 128
      %1099 = vsyncadd [#allocation4], %s1098
      %s1101 = sshll.u32 [#allocation11], 4
      %s1102 = int_to_ptr.vmem [resolvable:$true] %s1101
      %1104 = dma.vmem_to_hbm [thread:$0]  %s1102, 128, %s9, [#allocation4]
    $region61: #{tpu_custom_call.1} parent=1 // pred_fallthru
      _
    // Predicated region
    $region62: #{tpu_custom_call.1} parent=1 // pred_check
      _
    $region63: #{tpu_custom_call.1} parent=1 // pred_check_branch
      %1106 = sbr.rel (0) target = $region65
    $region64: #{tpu_custom_call.1} parent=1 // pred_region
      %1107 = dma.done [#allocation4], 128
    $region65: #{tpu_custom_call.1} parent=1 // pred_fallthru
      _
    %1108 = vsyncpa [#allocation3], 1
    %1109 = vsyncpa [#allocation6], 1
    %1110 = vsyncpa [#allocation9], 1
    %1111 = vsyncpa [#allocation4], 1

</llo_original>
